<compile_context>
chip_gen: v7x
topology: tpu7x:2x2x1
jax: 0.10.0
libtpu: 0.0.40
codegen_flags: <defaults>
</compile_context>

<pallas_src>
import jax
import jax.numpy as jnp
from jax.experimental import pallas as pl
from jax.experimental.pallas import tpu as pltpu


def _embedding_onehot_kernel(idx_ref, table_ref, out_ref):
    """One grid step: gather T embedding rows via a one-hot matmul on the MXU.

    idx_ref:   (T, 1) int32  -- token indices for this tile (VMEM)
    table_ref: (V, D) float  -- full embedding table, VMEM-resident
    out_ref:   (T, D) float  -- gathered embeddings
    """
    idx = idx_ref[...]                                    # (T, 1) int32
    tbl = table_ref[...]                                  # (V, D)
    t = out_ref.shape[0]
    v = tbl.shape[0]
    vocab_ids = jax.lax.broadcasted_iota(jnp.int32, (t, v), 1)
    one_hot = (idx == vocab_ids).astype(tbl.dtype)        # (T, V)
    out_ref[...] = jnp.dot(
        one_hot, tbl, preferred_element_type=jnp.float32
    ).astype(out_ref.dtype)


def integer_embedding_forward(indices, emb_table, *, tile_tokens=512):
    """indices: int [B, S]; emb_table: float [num_embeddings, D].
    Returns [B, S, D], matching nn.Embedding(x) forward semantics."""
    B, S = indices.shape
    V, D = emb_table.shape
    dtype = emb_table.dtype
    itemsize = jnp.dtype(dtype).itemsize

    flat_idx = indices.reshape(-1).astype(jnp.int32)
    n_tok = flat_idx.shape[0]

    # Token tile: multiple of 8 sublanes (f32), capped at tile_tokens.
    T = min(tile_tokens, max(8, ((n_tok + 7) // 8) * 8))
    n_tiles = pl.cdiv(n_tok, T)
    n_pad = n_tiles * T

    if n_pad != n_tok:
        flat_idx = jnp.pad(flat_idx, (0, n_pad - n_tok))
    # 2D (n_pad, 1) so the per-tile index block (T, 1) is sublane-major and
    # broadcasts cleanly against the (T, V) iota inside the kernel.
    idx2d = flat_idx.reshape(n_pad, 1)

    # Pad vocab rows to a multiple of 8 sublanes; pad rows are never selected.
    V_pad = ((V + 7) // 8) * 8
    table = emb_table
    if V_pad != V:
        table = jnp.pad(emb_table, ((0, V_pad - V), (0, 0)))

    table_bytes = V_pad * D * itemsize
    cost = pl.CostEstimate(
        flops=2 * n_pad * V_pad * D,
        transcendentals=0,
        bytes_accessed=n_pad * D * itemsize + table_bytes + n_pad * 4,
    )

    # VMEM budget: resident table + double-buffered (T, D) out + (T, 1) idx.
    vmem_needed = table_bytes + 2 * (T * D * itemsize + T * 4) + (1 << 20)
    compiler_kwargs = dict(dimension_semantics=("parallel",))
    if vmem_needed > (32 << 20):
        # Raise the scoped limit but stay inside v7x's 64 MiB physical VMEM.
        compiler_kwargs["vmem_limit_bytes"] = int(min(vmem_needed, 60 << 20))

    grid_spec = pltpu.PrefetchScalarGridSpec(
        num_scalar_prefetch=0,
        grid=(n_tiles,),
        in_specs=[
            # Per-tile token indices.
            pl.BlockSpec((T, 1), lambda i: (i, 0)),
            # Full embedding table, VMEM-resident (constant block index ->
            # fetched from HBM exactly once).
            pl.BlockSpec((V_pad, D), lambda i: (0, 0)),
        ],
        out_specs=pl.BlockSpec((T, D), lambda i: (i, 0)),
    )

    out_flat = pl.pallas_call(
        _embedding_onehot_kernel,
        out_shape=jax.ShapeDtypeStruct((n_pad, D), dtype),
        grid_spec=grid_spec,
        compiler_params=pltpu.CompilerParams(**compiler_kwargs),
        cost_estimate=cost,
    )(idx2d, table)

    if n_pad != n_tok:
        out_flat = out_flat[:n_tok]
    return out_flat.reshape(B, S, D)


if __name__ == "__main__":
    # Small shapes consistent with the module.
    num_embeddings = 16
    embedding_dim = 128
    batch, seq = 2, 8

    key = jax.random.PRNGKey(0)
    k_emb, k_idx = jax.random.split(key)

    # nn.Embedding default init: weights ~ N(0, 1).
    emb_table = jax.random.normal(
        k_emb, (num_embeddings, embedding_dim), dtype=jnp.float32
    )
    x = jax.random.randint(
        k_idx, (batch, seq), minval=0, maxval=num_embeddings, dtype=jnp.int32
    )

    out = integer_embedding_forward(x, emb_table)
    out = jax.block_until_ready(out)

    # Reference: plain JAX embedding lookup (== torch nn.Embedding forward).
    ref = emb_table[x]

    assert out.shape == (batch, seq, embedding_dim)
    assert out.dtype == jnp.float32
    assert jnp.allclose(out, ref), "Pallas embedding gather mismatch"

    print("KERNEL_OK")
</pallas_src>

<mosaic_0001>
module attributes {stable_mosaic.version = 11 : i64} {
  func.func @_embedding_onehot_kernel(%arg0: i32, %arg1: memref<16x1xi32, #tpu.memory_space<vmem>>, %arg2: memref<16x128xf32, #tpu.memory_space<vmem>>, %arg3: memref<16x128xf32, #tpu.memory_space<vmem>>) attributes {dimension_semantics = [#tpu.dimension_semantics<parallel>], iteration_bounds = array<i64: 1>, scalar_prefetch = 0 : i64, scratch_operands = 0 : i64, tpu.core_type = #tpu.core_type<tc>, window_params = [{transform_indices = @transform_0, window_bounds = array<i64: 16, 1>}, {pipeline_mode = #tpu.pipeline_mode<synchronous>, transform_indices = @transform_1, window_bounds = array<i64: 16, 128>}, {transform_indices = @transform_2, window_bounds = array<i64: 16, 128>}]} {
    %c0 = arith.constant 0 : index
    %c0_0 = arith.constant 0 : index
    %0 = vector.load %arg1[%c0, %c0_0] : memref<16x1xi32, #tpu.memory_space<vmem>>, vector<16x1xi32>
    %c0_1 = arith.constant 0 : index
    %c0_2 = arith.constant 0 : index
    %1 = vector.load %arg2[%c0_1, %c0_2] : memref<16x128xf32, #tpu.memory_space<vmem>>, vector<16x128xf32>
    %2 = tpu.iota {dimensions = array<i32: 1>} : vector<16x16xi32>
    %3 = vector.broadcast %0 : vector<16x1xi32> to vector<16x16xi32>
    %4 = arith.cmpi eq, %3, %2 : vector<16x16xi32>
    %5 = arith.extui %4 : vector<16x16xi1> to vector<16x16xi32>
    %6 = arith.sitofp %5 : vector<16x16xi32> to vector<16x16xf32>
    %cst = arith.constant dense<0.000000e+00> : vector<16x128xf32>
    %7 = tpu.matmul %6, %1, %cst {dimension_numbers = #tpu.dot_dimension_numbers<[1], [0], [0], [1], [0, 0, 1, 1], [], []>} : vector<16x16xf32>, vector<16x128xf32>, vector<16x128xf32> -> vector<16x128xf32>
    %c0_3 = arith.constant 0 : index
    %c0_4 = arith.constant 0 : index
    %8 = vector.load %arg3[%c0_3, %c0_4] : memref<16x128xf32, #tpu.memory_space<vmem>>, vector<16x128xf32>
    tpu.vector_store %arg3[%c0_3, %c0_4], %7 {strides = array<i32>} : memref<16x128xf32, #tpu.memory_space<vmem>>, vector<16x128xf32>,
    return
  }
  func.func @transform_0(%arg0: i32) -> (i32, i32) {
    %c0_i32 = arith.constant 0 : i32
    %c0_i32_0 = arith.constant 0 : i32
    return %arg0, %c0_i32 : i32, i32
  }
  func.func @transform_1(%arg0: i32) -> (i32, i32) {
    %c0_i32 = arith.constant 0 : i32
    %c0_i32_0 = arith.constant 0 : i32
    %c0_i32_1 = arith.constant 0 : i32
    return %c0_i32, %c0_i32_0 : i32, i32
  }
  func.func @transform_2(%arg0: i32) -> (i32, i32) {
    %c0_i32 = arith.constant 0 : i32
    %c0_i32_0 = arith.constant 0 : i32
    return %arg0, %c0_i32 : i32, i32
  }
}

</mosaic_0001>

<llo_original>
// kernel: tpu_custom_call.1
$region0: #{tpu_custom_call.1}
  #allocation0 [shape = 'u32[]', space=smem, size = 0x4, offset = 0x4, fixed_abs, tag = 'smem constant byte address 0x4 - core index']
  #allocation1 [shape = 'u32[144,128]{1,0:T(1,128)}', space=vmem, size = 0x12000, scoped, tag = 'internal scratch']
  %s0 = inlined_call_operand.vmem [shape: s32[16,1], index: 0, kind: input, shape index: {}]
  %s1 = inlined_call_operand.vmem [shape: f32[16,128], index: 1, kind: input, shape index: {}]
  %s2 = inlined_call_operand.hbm [shape: f32[16,128], index: 2, kind: output, shape index: {}]
  %s3 = sld [smem:[#allocation0]]
  $region18: #{tpu_custom_call.1} parent=0
    _
  %s5 = ssub.s32 1, %s3
  %s6 = scalar_select 0, %s5, %s3
  $region1: #{tpu_custom_call.1} parent=0
    #allocation2 [shape = 'u8[8192]{0}', space=vmem, size = 0x2000, scoped, tag = 'output window, operand 0, single buffered']
    #allocation3 [shape = 's32[1]{0}', space=sflag, size = 0x4, scoped, tag = 'scoped memory for tpu_custom_call.1']
    %7 = vsyncpa [#allocation3], 0
    // Predicated region
    $region2: #{tpu_custom_call.1} parent=1 // pred_check
      _
    $region3: #{tpu_custom_call.1} parent=1 // pred_check_branch
      %9 = sbr.rel (0) target = $region5
    $region4: #{tpu_custom_call.1} parent=1 // pred_region
      _
    $region5: #{tpu_custom_call.1} parent=1 // pred_fallthru
      _
    // Predicated region
    $region6: #{tpu_custom_call.1} parent=1 // pred_check
      _
    $region7: #{tpu_custom_call.1} parent=1 // pred_check_branch
      %11 = sbr.rel (0) target = $region9
    $region8: #{tpu_custom_call.1} parent=1 // pred_region
      _
    $region9: #{tpu_custom_call.1} parent=1 // pred_fallthru
      _
    %v12 = vld [vmem:[%s0] sm:$0xff]
    %v13 = vld [vmem:[%s0 + $0x8] sm:$0xff]
    %v14 = vld [vmem:[%s1] sm:$0xff]
    %v15 = vld [vmem:[%s1 + $0x8] sm:$0xff]
    %v16 = vlaneseq
    %v17 = vand.u32 %v16, 127
    %18 = vset.pattern.permute.xlu0 0
    %19 = vperm.xlu0 %18, %v12
    %v20 = vpop.permute.xlu0 %19
    %21 = vset.pattern.permute.xlu0 0
    %22 = vperm.xlu0 %21, %v13
    %v23 = vpop.permute.xlu0 %22
    %vm24 = vcmp.eq.s32.totalorder %v20, %v17
    %vm25 = vcmp.eq.s32.totalorder %v23, %v17
    %v26 = vsel %vm24, 1, 0
    %v27 = vsel %vm25, 1, 0
    %v28 = vcvt.s32.f32 %v26
    %v29 = vcvt.s32.f32 %v27
    %vm30 = vcmask 130048
    %v32 = vsel %vm30, %v28, 0
    %v35 = vsel %vm30, %v29, 0
    %37 = vmatprep.subr.mxu0 0.0
    %38 = vmatpush1.msra.mxu0 %v14
    %39 = vmatprep.subr.mxu0 0.0
    %40 = vmatpush1.msra.mxu0 %v15
    %41 = vmatprep.subr.mxu0 0.0
    %42 = vmatpush1.msra.mxu0 0.0
    %43 = vmatprep.subr.mxu0 0.0
    %44 = vmatpush1.msra.mxu0 0.0
    %45 = vmatprep.subr.mxu0 0.0
    %46 = vmatpush1.msra.mxu0 0.0
    %47 = vmatprep.subr.mxu0 0.0
    %48 = vmatpush1.msra.mxu0 0.0
    %49 = vmatprep.subr.mxu0 0.0
    %50 = vmatpush1.msra.mxu0 0.0
    %51 = vmatprep.subr.mxu0 0.0
    %52 = vmatpush1.msra.mxu0 0.0
    %53 = vmatprep.subr.mxu0 0.0
    %54 = vmatpush1.msra.mxu0 0.0
    %55 = vmatprep.subr.mxu0 0.0
    %56 = vmatpush1.msra.mxu0 0.0
    %57 = vmatprep.subr.mxu0 0.0
    %58 = vmatpush1.msra.mxu0 0.0
    %59 = vmatprep.subr.mxu0 0.0
    %60 = vmatpush1.msra.mxu0 0.0
    %61 = vmatprep.subr.mxu0 0.0
    %62 = vmatpush1.msra.mxu0 0.0
    %63 = vmatprep.subr.mxu0 0.0
    %64 = vmatpush1.msra.mxu0 0.0
    %65 = vmatprep.subr.mxu0 0.0
    %66 = vmatpush1.msra.mxu0 0.0
    %67 = vmatprep.subr.mxu0 0.0
    %68 = vmatpush1.msra.mxu0 0.0
    %69 = vmatprep.subr.mxu0 0.0
    %70 = vmatpush1.msra.mxu0 0.0
    %71 = vmatprep.subr.mxu0 0.0
    %72 = vmatpush1.msra.mxu0 0.0
    %73 = vmatprep.subr.mxu0 0.0
    %74 = vmatpush1.msra.mxu0 0.0
    %75 = vmatprep.subr.mxu0 0.0
    %76 = vmatpush1.msra.mxu0 0.0
    %77 = vmatprep.subr.mxu0 0.0
    %78 = vmatpush1.msra.mxu0 0.0
    %79 = vmatprep.subr.mxu0 0.0
    %80 = vmatpush1.msra.mxu0 0.0
    %81 = vmatprep.subr.mxu0 0.0
    %82 = vmatpush1.msra.mxu0 0.0
    %83 = vmatprep.subr.mxu0 0.0
    %84 = vmatpush1.msra.mxu0 0.0
    %85 = vmatprep.subr.mxu0 0.0
    %86 = vmatpush1.msra.mxu0 0.0
    %87 = vmatprep.subr.mxu0 0.0
    %88 = vmatpush1.msra.mxu0 0.0
    %89 = vmatprep.subr.mxu0 0.0
    %90 = vmatpush1.msra.mxu0 0.0
    %91 = vmatprep.subr.mxu0 0.0
    %92 = vmatpush1.msra.mxu0 0.0
    %93 = vmatprep.subr.mxu0 0.0
    %94 = vmatpush1.msra.mxu0 0.0
    %95 = vmatprep.subr.mxu0 0.0
    %96 = vmatpush1.msra.mxu0 0.0
    %97 = vmatprep.subr.mxu0 0.0
    %98 = vmatpush1.msra.mxu0 0.0
    %99 = vmatprep.subr.mxu0 0.0
    %100 = vmatpush1.msra.mxu0 0.0
    %101 = vmatprep.mubr.f32.mxu0 0.0
    %102 = vmatmul.mubr.f32.gmra.mrb[0].mxu0 %v32
    %v103 = vpop.f32.mrb[0].mxu0
    %v104 = vadd.f32 0.0, %v103
    %v105 = vpop.f32.mrb[0].mxu0
    %106 = vmatprep.mubr.f32.mxu0 0.0
    %107 = vmatmul.mubr.f32.gmra.mrb[0].mxu0 %v35
    %v108 = vpop.f32.mrb[0].mxu0
    %v109 = vadd.f32 0.0, %v108
    %v110 = vpop.f32.mrb[0].mxu0
    %111 = vdwg.mxu0
    %112 = vst [vmem:[#allocation2] sm:$0xff] %v104
    %113 = vst [vmem:[#allocation2 + $0x8] sm:$0xff] %v109
    // Predicated region
    $region10: #{tpu_custom_call.1} parent=1 // pred_check
      _
    $region11: #{tpu_custom_call.1} parent=1 // pred_check_branch
      %115 = sbr.rel (0) target = $region13
    $region12: #{tpu_custom_call.1} parent=1 // pred_region
      %s117 = ssub.s32 256, 256
      %118 = vsyncadd [#allocation3], %s117
      %s119 = sshll.u32 [#allocation2], 4
      %s120 = int_to_ptr.vmem [resolvable:$true] %s119
      %125 = dma.vmem_to_hbm [thread:$0]  %s120, 256, %s2, [#allocation3], 128, 128, 8
    $region13: #{tpu_custom_call.1} parent=1 // pred_fallthru
      _
    // Predicated region
    $region14: #{tpu_custom_call.1} parent=1 // pred_check
      _
    $region15: #{tpu_custom_call.1} parent=1 // pred_check_branch
      %127 = sbr.rel (0) target = $region17
    $region16: #{tpu_custom_call.1} parent=1 // pred_region
      %128 = dma.done [#allocation3], 256
    $region17: #{tpu_custom_call.1} parent=1 // pred_fallthru
      _
    %129 = vsyncpa [#allocation3], 1

</llo_original>
